<compile_context>
chip_gen: v6e
topology: v6e:2x2x1
jax: 0.10.0
libtpu: 0.0.40
codegen_flags: <defaults>
</compile_context>

<pallas_src>
import functools

import numpy as np
import jax
import jax.numpy as jnp
from jax.experimental import pallas as pl
from jax.experimental.pallas import tpu as pltpu


def _pool_plan(k, Wo):
    """Static lane-shift schedule: pre-max shifts, compaction steps, scratch pad."""
    max_disp = (k - 1) * (Wo - 1)          # displacement of the last kept lane
    steps = []
    b = 0
    while (1 << b) <= max_disp:
        steps.append(1 << b)
        b += 1
    pre = list(range(1, k))
    pad = max(pre + steps + [0])
    return pre, steps, pad


def _maxpool_kernel(x_ref, o_ref, slide_ref, *, k, W, Wo):
    """One row-block of k x k / stride-k max pooling on the natural NCHW layout.

    x_ref     : (tm, k*W)    k input image rows per view-row, concatenated on lanes
    o_ref     : (tm, Wo)     pooled output rows (lane-dense, full output width)
    slide_ref : (tm, W+pad)  VMEM scratch used to realize static lane shifts
    """
    pre_shifts, gather_steps, _ = _pool_plan(k, Wo)
    x = x_ref[...]

    # ---- pool along H: max over the k contiguous lane chunks (one per image row).
    r = x[:, 0:W]
    for kk in range(1, k):
        r = jnp.maximum(r, x[:, kk * W:(kk + 1) * W])

    # shifted(v, s)[:, l] == v[:, l + s].  Lanes l >= W - s read scratch tail
    # garbage, but such lanes never feed a kept output lane (see invariant below).
    def shifted(v, s):
        slide_ref[:, 0:W] = v
        return slide_ref[:, s:s + W]

    # ---- pool along W, step 1: p[:, l] = max(r[:, l], ..., r[:, l+k-1]);
    # lane l = k*j now holds the full window max for output column j.
    p = r
    for t in pre_shifts:
        p = jnp.maximum(p, shifted(r, t))

    # ---- pool along W, step 2: exact stride-k lane compaction via bit-decomposed
    # shifts.  Invariant after processing bit b (step = 2**b):
    #   a[:, l] == p[:, l + (((k-1)*l) mod 2**(b+1))]
    # so after all steps a[:, j] == p[:, k*j] for every kept lane j < Wo.
    # Pure data movement + selects: exact for every value (NaN/inf included).
    a = p
    if gather_steps:
        lane = jax.lax.broadcasted_iota(jnp.int32, a.shape, dimension=1)
        disp = (k - 1) * lane
        for step in gather_steps:
            a = jnp.where((disp & step) != 0, shifted(a, step), a)

    o_ref[...] = a[:, 0:Wo]


def max_pool2d(x, k=2, *, target_block_bytes=4 * 1024 * 1024):
    """Forward of MP: nn.MaxPool2d(kernel_size=k, stride=k) on NCHW input."""
    B, C, H, W_in = x.shape
    Ho, Wo = H // k, W_in // k
    if Ho == 0 or Wo == 0:
        raise ValueError("input spatial size smaller than the pooling window")
    W = Wo * k  # floor-mode (ceil_mode=False) cropped width

    # Floor-mode crop (no-op when divisible), then a *free* row-major view:
    # (B, C, Ho, k, W) -> (M, k*W).  No transpose, no HBM copy.
    xc = x[:, :, :Ho * k, :W]
    M = B * C * Ho
    xv = xc.reshape(M, k * W)

    itemsize = jnp.dtype(x.dtype).itemsize
    sub = max(8, 32 // itemsize)               # sublane quantum for this dtype
    row_bytes = k * W * itemsize

    # Row-block size: ~target_block_bytes of input per grid step (amortizes the
    # ~0.35us per-step overhead), rounded to the sublane quantum, and split into
    # >= 2 grid steps when M allows so both v7x TensorCores get work.  Worst-case
    # double-buffered footprint (2*in + 2*out + scratch) stays well under the
    # 32 MiB limit requested below (and under v5e's tighter budget).
    tm = max(sub, (target_block_bytes // row_bytes) // sub * sub)
    if tm >= M:
        half = ((M + 1) // 2 + sub - 1) // sub * sub
        tm = half if half < M else M
    tm = min(tm, M)

    _, _, pad = _pool_plan(k, Wo)
    grid = (pl.cdiv(M, tm),)

    kernel = functools.partial(_maxpool_kernel, k=k, W=W, Wo=Wo)
    out = pl.pallas_call(
        kernel,
        out_shape=jax.ShapeDtypeStruct((M, Wo), x.dtype),
        grid=grid,
        in_specs=[pl.BlockSpec((tm, k * W), lambda i: (i, 0))],
        out_specs=pl.BlockSpec((tm, Wo), lambda i: (i, 0)),
        scratch_shapes=[pltpu.VMEM((tm, W + pad), x.dtype)],
        compiler_params=pltpu.CompilerParams(
            dimension_semantics=("parallel",),
            vmem_limit_bytes=32 * 1024 * 1024,
        ),
    )(xv)

    return out.reshape(B, C, Ho, Wo)


def _reference(x, k=2):
    """Pure-JAX reference (floor-mode 2D max pool) for verification."""
    B, C, H, W = x.shape
    Ho, Wo = H // k, W // k
    xr = x[:, :, :Ho * k, :Wo * k].reshape(B, C, Ho, k, Wo, k)
    return xr.max(axis=(3, 5))


if __name__ == "__main__":
    key = jax.random.PRNGKey(0)
    k1, k2 = jax.random.split(key)

    # Shapes consistent with the module: B=2, C=4, 16x16 spatial, k=2.
    x = jax.random.normal(k1, (2, 4, 16, 16), dtype=jnp.float32)
    out = jax.block_until_ready(max_pool2d(x, k=2))
    assert out.shape == (2, 4, 8, 8)
    np.testing.assert_array_equal(np.asarray(out), np.asarray(_reference(x, k=2)))

    # Odd spatial size (floor-mode crop) + partial last grid block (M % tm != 0).
    x2 = jax.random.normal(k2, (1, 3, 11, 8), dtype=jnp.float32)
    out2 = jax.block_until_ready(max_pool2d(x2, k=2))
    assert out2.shape == (1, 3, 5, 4)
    np.testing.assert_array_equal(np.asarray(out2), np.asarray(_reference(x2, k=2)))

    print("KERNEL_OK")
</pallas_src>

<mosaic_0001>
module attributes {stable_mosaic.version = 11 : i64} {
  func.func @_maxpool_kernel(%arg0: i32, %arg1: memref<32x32xf32, #tpu.memory_space<vmem>>, %arg2: memref<32x8xf32, #tpu.memory_space<vmem>>, %arg3: memref<32x20xf32, #tpu.memory_space<vmem>>) attributes {dimension_semantics = [#tpu.dimension_semantics<parallel>], iteration_bounds = array<i64: 2>, scalar_prefetch = 0 : i64, scratch_operands = 1 : i64, tpu.core_type = #tpu.core_type<tc>, window_params = [{transform_indices = @transform_0, window_bounds = array<i64: 32, 32>}, {transform_indices = @transform_1, window_bounds = array<i64: 32, 8>}]} {
    %c0 = arith.constant 0 : index
    %c0_0 = arith.constant 0 : index
    %0 = vector.load %arg1[%c0, %c0_0] : memref<32x32xf32, #tpu.memory_space<vmem>>, vector<32x32xf32>
    %1 = vector.extract_strided_slice %0 {offsets = [0, 0], sizes = [32, 16], strides = [1, 1]} : vector<32x32xf32> to vector<32x16xf32>
    %2 = vector.extract_strided_slice %0 {offsets = [0, 16], sizes = [32, 16], strides = [1, 1]} : vector<32x32xf32> to vector<32x16xf32>
    %3 = arith.maximumf %1, %2 : vector<32x16xf32>
    %c0_1 = arith.constant 0 : index
    %c0_2 = arith.constant 0 : index
    %4 = vector.load %arg3[%c0_1, %c0_2] : memref<32x20xf32, #tpu.memory_space<vmem>>, vector<32x16xf32>
    tpu.vector_store %arg3[%c0_1, %c0_2], %3 {strides = array<i32>} : memref<32x20xf32, #tpu.memory_space<vmem>>, vector<32x16xf32>,
    %c0_3 = arith.constant 0 : index
    %c1 = arith.constant 1 : index
    %5 = vector.load %arg3[%c0_3, %c1] : memref<32x20xf32, #tpu.memory_space<vmem>>, vector<32x16xf32>
    %6 = arith.maximumf %3, %5 : vector<32x16xf32>
    %7 = tpu.iota {dimensions = array<i32: 1>} : vector<32x16xi32>
    %c1_i32 = arith.constant 1 : i32
    %8 = vector.broadcast %c1_i32 : i32 to vector<32x16xi32>
    %9 = arith.muli %8, %7 : vector<32x16xi32>
    %c1_i32_4 = arith.constant 1 : i32
    %10 = vector.broadcast %c1_i32_4 : i32 to vector<32x16xi32>
    %11 = arith.andi %9, %10 : vector<32x16xi32>
    %c0_i32 = arith.constant 0 : i32
    %12 = vector.broadcast %c0_i32 : i32 to vector<32x16xi32>
    %13 = arith.cmpi ne, %11, %12 : vector<32x16xi32>
    %c0_5 = arith.constant 0 : index
    %c0_6 = arith.constant 0 : index
    %14 = vector.load %arg3[%c0_5, %c0_6] : memref<32x20xf32, #tpu.memory_space<vmem>>, vector<32x16xf32>
    tpu.vector_store %arg3[%c0_5, %c0_6], %6 {strides = array<i32>} : memref<32x20xf32, #tpu.memory_space<vmem>>, vector<32x16xf32>,
    %c0_7 = arith.constant 0 : index
    %c1_8 = arith.constant 1 : index
    %15 = vector.load %arg3[%c0_7, %c1_8] : memref<32x20xf32, #tpu.memory_space<vmem>>, vector<32x16xf32>
    %16 = arith.select %13, %15, %6 : vector<32x16xi1>, vector<32x16xf32>
    %c2_i32 = arith.constant 2 : i32
    %17 = vector.broadcast %c2_i32 : i32 to vector<32x16xi32>
    %18 = arith.andi %9, %17 : vector<32x16xi32>
    %c0_i32_9 = arith.constant 0 : i32
    %19 = vector.broadcast %c0_i32_9 : i32 to vector<32x16xi32>
    %20 = arith.cmpi ne, %18, %19 : vector<32x16xi32>
    %c0_10 = arith.constant 0 : index
    %c0_11 = arith.constant 0 : index
    %21 = vector.load %arg3[%c0_10, %c0_11] : memref<32x20xf32, #tpu.memory_space<vmem>>, vector<32x16xf32>
    tpu.vector_store %arg3[%c0_10, %c0_11], %16 {strides = array<i32>} : memref<32x20xf32, #tpu.memory_space<vmem>>, vector<32x16xf32>,
    %c0_12 = arith.constant 0 : index
    %c2 = arith.constant 2 : index
    %22 = vector.load %arg3[%c0_12, %c2] : memref<32x20xf32, #tpu.memory_space<vmem>>, vector<32x16xf32>
    %23 = arith.select %20, %22, %16 : vector<32x16xi1>, vector<32x16xf32>
    %c4_i32 = arith.constant 4 : i32
    %24 = vector.broadcast %c4_i32 : i32 to vector<32x16xi32>
    %25 = arith.andi %9, %24 : vector<32x16xi32>
    %c0_i32_13 = arith.constant 0 : i32
    %26 = vector.broadcast %c0_i32_13 : i32 to vector<32x16xi32>
    %27 = arith.cmpi ne, %25, %26 : vector<32x16xi32>
    %c0_14 = arith.constant 0 : index
    %c0_15 = arith.constant 0 : index
    %28 = vector.load %arg3[%c0_14, %c0_15] : memref<32x20xf32, #tpu.memory_space<vmem>>, vector<32x16xf32>
    tpu.vector_store %arg3[%c0_14, %c0_15], %23 {strides = array<i32>} : memref<32x20xf32, #tpu.memory_space<vmem>>, vector<32x16xf32>,
    %c0_16 = arith.constant 0 : index
    %c4 = arith.constant 4 : index
    %29 = vector.load %arg3[%c0_16, %c4] : memref<32x20xf32, #tpu.memory_space<vmem>>, vector<32x16xf32>
    %30 = arith.select %27, %29, %23 : vector<32x16xi1>, vector<32x16xf32>
    %31 = vector.extract_strided_slice %30 {offsets = [0, 0], sizes = [32, 8], strides = [1, 1]} : vector<32x16xf32> to vector<32x8xf32>
    %c0_17 = arith.constant 0 : index
    %c0_18 = arith.constant 0 : index
    %32 = vector.load %arg2[%c0_17, %c0_18] : memref<32x8xf32, #tpu.memory_space<vmem>>, vector<32x8xf32>
    tpu.vector_store %arg2[%c0_17, %c0_18], %31 {strides = array<i32>} : memref<32x8xf32, #tpu.memory_space<vmem>>, vector<32x8xf32>,
    return
  }
  func.func @transform_0(%arg0: i32) -> (i32, i32) {
    %c0_i32 = arith.constant 0 : i32
    %c0_i32_0 = arith.constant 0 : i32
    return %arg0, %c0_i32 : i32, i32
  }
  func.func @transform_1(%arg0: i32) -> (i32, i32) {
    %c0_i32 = arith.constant 0 : i32
    %c0_i32_0 = arith.constant 0 : i32
    return %arg0, %c0_i32 : i32, i32
  }
}

</mosaic_0001>

<llo_original>
// kernel: tpu_custom_call.1
$region0: #{tpu_custom_call.1}
  #allocation0 [shape = 'u32[]', space=smem, size = 0x4, offset = 0x4, fixed_abs, tag = 'smem constant byte address 0x4 - core index']
  #allocation1 [shape = 'u32[144,128]{1,0:T(1,128)}', space=vmem, size = 0x12000, scoped, tag = 'internal scratch']
  #allocation2 [shape = 'f32[32,20]{1,0:T(8,128)}', space=vmem, size = 0x4000, scoped, tag = 'scratch operand']
  %s0 = inlined_call_operand.vmem [shape: f32[64,32], index: 0, kind: input, shape index: {}]
  %s1 = inlined_call_operand.vmem [shape: f32[64,8], index: 1, kind: output, shape index: {}]
  %s2 = sld [smem:[#allocation0]]
  $region37: #{tpu_custom_call.1} parent=0
    _
  %s4 = ssub.s32 1, %s2
  %s5 = scalar_select 0, %s4, %s2
  loop: start=0, step=1, limit=4
  $region2: #{tpu_custom_call.1} parent=0 // loop_pre_header
    _
  $region3: #{tpu_custom_call.1} parent=0 // loop_header
    %s7 = sphi 0, %s11
    %p8 = scmp.ge.s32.totalorder %s7, 4
    %s17 = sphi 0, %s19
    %s20 = sphi 0, %s17
    %s21 = sphi 0, %s20
    %s37 = sphi 0, %s21
    %s43 = sphi 0, %s45
    %s46 = sphi 0, %s43
    %s47 = sphi 0, %s46
    %s63 = sphi 0, %s47
  $region4: #{tpu_custom_call.1} parent=0 // loop_header_branch
    %10 = sbr.rel (%p8) target = $region8
  $region5: #{tpu_custom_call.1} parent=0 // loop_body
    %s12 = ssub.s32 %s7, 1
    %s13 = ssub.s32 %s7, 2
    %s14 = sadd.s32 %s7, 1
    %s15 = ssub.s32 %s7, %s14
    %p16 = scmp.eq.s32.totalorder %s15, 0
    %s18 = sadd.s32 %s17, 1
    %s19 = scalar_select %p16, %s17, %s18
    %p22 = pneg %p16
    %p23 = scmp.eq.s32.totalorder %s7, 1
    %p24 = por %p22, %p23
    %p25 = scmp.ne.s32.totalorder %s17, %s20
    %p26 = scmp.eq.s32.totalorder %s7, 0
    %p27 = por %p25, %p26
    %p28 = scmp.ne.s32.totalorder %s17, %s20
    %p29 = scmp.eq.s32.totalorder %s12, 1
    %p30 = por %p28, %p29
    %p31 = scmp.ne.s32.totalorder %s20, %s21
    %p32 = scmp.eq.s32.totalorder %s12, 0
    %p33 = por %p31, %p32
    %p34 = scmp.ne.s32.totalorder %s20, %s21
    %p35 = scmp.eq.s32.totalorder %s13, 1
    %p36 = por %p34, %p35
    %p38 = scmp.ne.s32.totalorder %s21, %s37
    %p39 = scmp.eq.s32.totalorder %s13, 0
    %p40 = por %p38, %p39
    %s41 = ssub.s32 %s7, %s14
    %p42 = scmp.eq.s32.totalorder %s41, 0
    %s44 = sadd.s32 %s43, 1
    %s45 = scalar_select %p42, %s43, %s44
    %p48 = pneg %p42
    %p49 = scmp.eq.s32.totalorder %s7, 1
    %p50 = por %p48, %p49
    %p51 = scmp.ne.s32.totalorder %s43, %s46
    %p52 = scmp.eq.s32.totalorder %s7, 0
    %p53 = por %p51, %p52
    %p54 = scmp.ne.s32.totalorder %s43, %s46
    %p55 = scmp.eq.s32.totalorder %s12, 1
    %p56 = por %p54, %p55
    %p57 = scmp.ne.s32.totalorder %s46, %s47
    %p58 = scmp.eq.s32.totalorder %s12, 0
    %p59 = por %p57, %p58
    %p60 = scmp.ne.s32.totalorder %s46, %s47
    %p61 = scmp.eq.s32.totalorder %s13, 1
    %p62 = por %p60, %p61
    %p64 = scmp.ne.s32.totalorder %s47, %s63
    %p65 = scmp.eq.s32.totalorder %s13, 0
    %p66 = por %p64, %p65
    %p67 = scmp.le.s32.totalorder 1, %s7
    %p68 = scmp.lt.s32.totalorder %s7, 3
    %p69 = pnand %p67, %p68
    %p70 = pneg %p69
    // Predicated region
    $region9: #{tpu_custom_call.1} parent=5 // pred_check
      _
    $region10: #{tpu_custom_call.1} parent=5 // pred_check_branch
      %72 = sbr.rel (%p69) target = $region12
    $region11: #{tpu_custom_call.1} parent=5 // pred_region
      %s73 = ssub.s32 %s7, 1
    $region12: #{tpu_custom_call.1} parent=5 // pred_fallthru
      _
    %p74 = scmp.lt.s32.totalorder %s7, 2
    // Predicated region
    $region13: #{tpu_custom_call.1} parent=5 // pred_check
      %p75 = pneg %p74
    $region14: #{tpu_custom_call.1} parent=5 // pred_check_branch
      %77 = sbr.rel (%p75) target = $region16
    $region15: #{tpu_custom_call.1} parent=5 // pred_region
      // Predicated region
      $region17: #{tpu_custom_call.1} parent=15 // pred_check
        %p78 = pneg %p27
      $region18: #{tpu_custom_call.1} parent=15 // pred_check_branch
        %80 = sbr.rel (%p78) target = $region20
      $region19: #{tpu_custom_call.1} parent=15 // pred_region
        %s81 = smul.u32 4, %s7
        %p82 = scmp.lt.s32.totalorder %s81, 7
        %s83 = scalar_select %p82, %s81, 7
        %s84 = smul.addr %s83, 8
        %s85 = scalar_lea.vmem %s0, %s84
        %s86 = smul.u32 4, %s7
      $region20: #{tpu_custom_call.1} parent=15 // pred_fallthru
        _
    $region16: #{tpu_custom_call.1} parent=5 // pred_fallthru
      _
    %p87 = scmp.le.s32.totalorder 1, %s7
    %p88 = scmp.lt.s32.totalorder %s7, 3
    %p89 = pnand %p87, %p88
    %p90 = pneg %p89
    // Predicated region
    $region21: #{tpu_custom_call.1} parent=5 // pred_check
      _
    $region22: #{tpu_custom_call.1} parent=5 // pred_check_branch
      %92 = sbr.rel (%p89) target = $region24
    $region23: #{tpu_custom_call.1} parent=5 // pred_region
      %s93 = ssub.s32 %s7, 1
      %s94 = smul.u32 4, %s12
      %p95 = scmp.lt.s32.totalorder %s94, 7
      %s96 = scalar_select %p95, %s94, 7
      %s97 = smul.addr %s96, 8
      %s98 = scalar_lea.vmem %s0, %s97
      %p99 = pneg %p33
      %p100 = pneg %p30
      %p101 = pneg %p59
      %p102 = pneg %p56
      %s103 = smul.u32 4, %s12
      %p104 = scmp.lt.s32.totalorder %s103, 7
      %s105 = scalar_select %p104, %s103, 7
      %s106 = smul.addr %s105, 8
      %s107 = scalar_lea.vmem %s1, %s106
      %s108 = smul.u32 4, %s12
      %p109 = scmp.lt.s32.totalorder %s108, 7
      %s110 = scalar_select %p109, %s108, 7
      %s111 = smul.addr %s110, 8
      %s112 = scalar_lea.vmem %s0, %s111
      %s113 = smul.u32 4, %s12
      %s114 = smul.u32 4, %s12
      %p115 = scmp.lt.s32.totalorder %s114, 7
      %s116 = scalar_select %p115, %s114, 7
      %s117 = smul.addr %s116, 8
      %s118 = scalar_lea.vmem %s1, %s117
      %s119 = smul.u32 4, %s12
      %v120 = vld [vmem:[%s112] sm:$0xff]
      %v121 = vld [vmem:[%s112 + $0x8] sm:$0xff]
      %v122 = vld [vmem:[%s112 + $0x10] sm:$0xff]
      %v123 = vld [vmem:[%s112 + $0x18] sm:$0xff]
      %128 = vrot.lane.b32.xlu0 %v120, 112
      %v129 = vpop.permute.xlu0 %128
      %130 = vrot.lane.b32.xlu0 %v121, 112
      %v131 = vpop.permute.xlu0 %130
      %132 = vrot.lane.b32.xlu0 %v122, 112
      %v133 = vpop.permute.xlu0 %132
      %134 = vrot.lane.b32.xlu0 %v123, 112
      %v135 = vpop.permute.xlu0 %134
      %v140 = vmax.f32 %v120, %v129
      %v141 = vmax.f32 %v121, %v131
      %v142 = vmax.f32 %v122, %v133
      %v143 = vmax.f32 %v123, %v135
      %vm144 = vcmask 130048
      %145 = vst.msk [vmem:[#allocation2] sm:$0xff] %vm144, %v140
      %146 = vst.msk [vmem:[#allocation2 + $0x8] sm:$0xff] %vm144, %v141
      %147 = vst.msk [vmem:[#allocation2 + $0x10] sm:$0xff] %vm144, %v142
      %148 = vst.msk [vmem:[#allocation2 + $0x18] sm:$0xff] %vm144, %v143
      %v149 = vld [vmem:[#allocation2] sm:$0xff]
      %v150 = vld [vmem:[#allocation2 + $0x8] sm:$0xff]
      %v151 = vld [vmem:[#allocation2 + $0x10] sm:$0xff]
      %v152 = vld [vmem:[#allocation2 + $0x18] sm:$0xff]
      %157 = vrot.lane.b32.xlu0 %v149, 127
      %v158 = vpop.permute.xlu0 %157
      %159 = vrot.lane.b32.xlu0 %v150, 127
      %v160 = vpop.permute.xlu0 %159
      %161 = vrot.lane.b32.xlu0 %v151, 127
      %v162 = vpop.permute.xlu0 %161
      %163 = vrot.lane.b32.xlu0 %v152, 127
      %v164 = vpop.permute.xlu0 %163
      %v169 = vmax.f32 %v140, %v158
      %v170 = vmax.f32 %v141, %v160
      %v171 = vmax.f32 %v142, %v162
      %v172 = vmax.f32 %v143, %v164
      %v173 = vlaneseq
      %v174 = vand.u32 %v173, 127
      %v175 = vand.u32 %v174, 1
      %vm176 = vcmp.ne.s32.totalorder %v175, 0
      %177 = vst.msk [vmem:[#allocation2] sm:$0xff] %vm144, %v169
      %178 = vst.msk [vmem:[#allocation2 + $0x8] sm:$0xff] %vm144, %v170
      %179 = vst.msk [vmem:[#allocation2 + $0x10] sm:$0xff] %vm144, %v171
      %180 = vst.msk [vmem:[#allocation2 + $0x18] sm:$0xff] %vm144, %v172
      %v181 = vld [vmem:[#allocation2] sm:$0xff]
      %v182 = vld [vmem:[#allocation2 + $0x8] sm:$0xff]
      %v183 = vld [vmem:[#allocation2 + $0x10] sm:$0xff]
      %v184 = vld [vmem:[#allocation2 + $0x18] sm:$0xff]
      %189 = vrot.lane.b32.xlu0 %v181, 127
      %v190 = vpop.permute.xlu0 %189
      %191 = vrot.lane.b32.xlu0 %v182, 127
      %v192 = vpop.permute.xlu0 %191
      %193 = vrot.lane.b32.xlu0 %v183, 127
      %v194 = vpop.permute.xlu0 %193
      %195 = vrot.lane.b32.xlu0 %v184, 127
      %v196 = vpop.permute.xlu0 %195
      %v201 = vsel %vm176, %v190, %v169
      %v202 = vsel %vm176, %v192, %v170
      %v203 = vsel %vm176, %v194, %v171
      %v204 = vsel %vm176, %v196, %v172
      %v205 = vand.u32 %v174, 2
      %vm206 = vcmp.ne.s32.totalorder %v205, 0
      %207 = vst.msk [vmem:[#allocation2] sm:$0xff] %vm144, %v201
      %208 = vst.msk [vmem:[#allocation2 + $0x8] sm:$0xff] %vm144, %v202
      %209 = vst.msk [vmem:[#allocation2 + $0x10] sm:$0xff] %vm144, %v203
      %210 = vst.msk [vmem:[#allocation2 + $0x18] sm:$0xff] %vm144, %v204
      %v211 = vld [vmem:[#allocation2] sm:$0xff]
      %v212 = vld [vmem:[#allocation2 + $0x8] sm:$0xff]
      %v213 = vld [vmem:[#allocation2 + $0x10] sm:$0xff]
      %v214 = vld [vmem:[#allocation2 + $0x18] sm:$0xff]
      %219 = vrot.lane.b32.xlu0 %v211, 126
      %v220 = vpop.permute.xlu0 %219
      %221 = vrot.lane.b32.xlu0 %v212, 126
      %v222 = vpop.permute.xlu0 %221
      %223 = vrot.lane.b32.xlu0 %v213, 126
      %v224 = vpop.permute.xlu0 %223
      %225 = vrot.lane.b32.xlu0 %v214, 126
      %v226 = vpop.permute.xlu0 %225
      %v231 = vsel %vm206, %v220, %v201
      %v232 = vsel %vm206, %v222, %v202
      %v233 = vsel %vm206, %v224, %v203
      %v234 = vsel %vm206, %v226, %v204
      %v235 = vand.u32 %v174, 4
      %vm236 = vcmp.ne.s32.totalorder %v235, 0
      %237 = vst.msk [vmem:[#allocation2] sm:$0xff] %vm144, %v231
      %238 = vst.msk [vmem:[#allocation2 + $0x8] sm:$0xff] %vm144, %v232
      %239 = vst.msk [vmem:[#allocation2 + $0x10] sm:$0xff] %vm144, %v233
      %240 = vst.msk [vmem:[#allocation2 + $0x18] sm:$0xff] %vm144, %v234
      %v241 = vld [vmem:[#allocation2] sm:$0xff]
      %v242 = vld [vmem:[#allocation2 + $0x8] sm:$0xff]
      %v243 = vld [vmem:[#allocation2 + $0x10] sm:$0xff]
      %v244 = vld [vmem:[#allocation2 + $0x18] sm:$0xff]
      %249 = vrot.lane.b32.xlu0 %v241, 124
      %v250 = vpop.permute.xlu0 %249
      %251 = vrot.lane.b32.xlu0 %v242, 124
      %v252 = vpop.permute.xlu0 %251
      %253 = vrot.lane.b32.xlu0 %v243, 124
      %v254 = vpop.permute.xlu0 %253
      %255 = vrot.lane.b32.xlu0 %v244, 124
      %v256 = vpop.permute.xlu0 %255
      %v261 = vsel %vm236, %v250, %v231
      %v262 = vsel %vm236, %v252, %v232
      %v263 = vsel %vm236, %v254, %v233
      %v264 = vsel %vm236, %v256, %v234
      %vm265 = vcmask 64512
      %266 = vst.msk [vmem:[%s118] sm:$0xff] %vm265, %v261
      %267 = vst.msk [vmem:[%s118 + $0x8] sm:$0xff] %vm265, %v262
      %268 = vst.msk [vmem:[%s118 + $0x10] sm:$0xff] %vm265, %v263
      %269 = vst.msk [vmem:[%s118 + $0x18] sm:$0xff] %vm265, %v264
      %s270 = smul.u32 4, %s12
      %p271 = scmp.lt.s32.totalorder %s270, 7
      %s272 = scalar_select %p271, %s270, 7
      %s273 = smul.addr %s272, 8
      %s274 = scalar_lea.vmem %s1, %s273
      // Predicated region
      $region25: #{tpu_custom_call.1} parent=23 // pred_check
        %p275 = pneg %p56
      $region26: #{tpu_custom_call.1} parent=23 // pred_check_branch
        %277 = sbr.rel (%p275) target = $region28
      $region27: #{tpu_custom_call.1} parent=23 // pred_region
        %s278 = smul.u32 4, %s12
      $region28: #{tpu_custom_call.1} parent=23 // pred_fallthru
        _
    $region24: #{tpu_custom_call.1} parent=5 // pred_fallthru
      _
    %p279 = scmp.le.s32.totalorder 2, %s7
    // Predicated region
    $region29: #{tpu_custom_call.1} parent=5 // pred_check
      %p280 = pneg %p279
    $region30: #{tpu_custom_call.1} parent=5 // pred_check_branch
      %282 = sbr.rel (%p280) target = $region32
    $region31: #{tpu_custom_call.1} parent=5 // pred_region
      %s283 = ssub.s32 %s7, 2
      // Predicated region
      $region33: #{tpu_custom_call.1} parent=31 // pred_check
        %p284 = pneg %p62
      $region34: #{tpu_custom_call.1} parent=31 // pred_check_branch
        %286 = sbr.rel (%p284) target = $region36
      $region35: #{tpu_custom_call.1} parent=31 // pred_region
        %s287 = smul.u32 4, %s13
        %p288 = scmp.lt.s32.totalorder %s287, 7
        %s289 = scalar_select %p288, %s287, 7
        %s290 = smul.addr %s289, 8
        %s291 = scalar_lea.vmem %s1, %s290
      $region36: #{tpu_custom_call.1} parent=31 // pred_fallthru
        _
    $region32: #{tpu_custom_call.1} parent=5 // pred_fallthru
      _
  $region6: #{tpu_custom_call.1} parent=0 // loop_footer
    %s11 = sadd.s32 1, %s7
  $region7: #{tpu_custom_call.1} parent=0 // loop_footer_branch
    %6 = sbr.rel target = $region3
  $region8: #{tpu_custom_call.1} parent=0 // loop_exit
    _

</llo_original>
